<compile_context>
chip_gen: v5e
topology: v5e:2x2
jax: 0.10.0
libtpu: 0.0.40
codegen_flags: <defaults>
</compile_context>

<pallas_src>
import functools

import jax
import jax.numpy as jnp
from jax.experimental import pallas as pl
from jax.experimental.pallas import tpu as pltpu


_LANE = 128      # lane width: layer output dims padded to this -> lane-dense tiles
_SUBLANE = 8     # sublane width: batch-row / first-layer-K padding granularity


def _round_up(x, m):
    return ((x + m - 1) // m) * m


def _mlp_kernel(n_layers, x_ref, w_ref, b_ref, o_ref):
    """Fused padded MLP for one batch tile.

    x_ref: (TB, k0)            f32 state tile (k0 = n_inp rounded up to 8)
    w_ref: (L, d_pad, d_pad)   bf16 packed weights, (in, out) layout, zero padded
    b_ref: (L, 1, d_pad)       f32 packed biases, zero padded
    o_ref: (TB, d_pad)         f32 output tile (real cols = [:, :n_actions])
    """
    h = x_ref[...]                                      # f32
    for l in range(n_layers):
        k = h.shape[1]                                  # k0 for l==0, d_pad after
        w = w_ref[l, 0:k, :]                            # static slice -> zero runtime cost
        b = b_ref[l]                                    # (1, d_pad) f32, broadcasts
        h = jnp.dot(h.astype(w_ref.dtype), w,           # bf16 x bf16 -> f32 on the MXU
                    preferred_element_type=jnp.float32) + b
        if l != n_layers - 1:                           # no ReLU after the last Linear
            h = jnp.maximum(h, 0.0)
    o_ref[...] = h


def pack_params(params, d_pad=_LANE, param_dtype=jnp.bfloat16):
    """Pack [(W(in,out), b(1,out)), ...] into zero-padded buffers.

    Returns (w_packed, b_packed, dims):
      w_packed: (L, d_pad, d_pad) param_dtype   weights, (in, out) layout
      b_packed: (L, 1, d_pad)     float32       biases (kept f32 per perf review)
      dims:     tuple of (fan_in, fan_out)      real layer sizes (for CostEstimate)
    """
    n_layers = len(params)
    w_packed = jnp.zeros((n_layers, d_pad, d_pad), param_dtype)
    b_packed = jnp.zeros((n_layers, 1, d_pad), jnp.float32)
    dims = []
    for l, (w, b) in enumerate(params):
        fan_in, fan_out = w.shape
        assert fan_in <= d_pad and fan_out <= d_pad
        w_packed = w_packed.at[l, :fan_in, :fan_out].set(w.astype(param_dtype))
        b_packed = b_packed.at[l, 0, :fan_out].set(b.reshape(-1).astype(jnp.float32))
        dims.append((fan_in, fan_out))
    return w_packed, b_packed, tuple(dims)


def linear_dqn_forward(state, w_packed, b_packed, n_actions, dims=None,
                       *, batch_tile=None):
    """Run the fused MLP Pallas kernel.

    state:     (batch, n_inp) float32
    w_packed:  (L, d_pad, d_pad)  packed weights from pack_params()
    b_packed:  (L, 1, d_pad) f32  packed biases  from pack_params()
    n_actions: number of real output columns
    dims:      real (fan_in, fan_out) per layer, for the cost estimate
    """
    batch, n_inp = state.shape
    n_layers, d_pad, d_pad2 = w_packed.shape
    assert d_pad == d_pad2
    assert b_packed.shape == (n_layers, 1, d_pad)
    assert n_inp <= d_pad and n_actions <= d_pad

    # --- batch tiling ------------------------------------------------------
    # Small batches: one grid step with the whole (sublane-padded) batch as a
    # single block.  Large batches: 128-row tiles, sharded over TCs.
    b8 = _round_up(batch, _SUBLANE)
    if batch_tile is None:
        batch_tile = b8 if b8 <= 256 else 128
    batch_tile = _round_up(batch_tile, _SUBLANE)
    n_tiles = pl.cdiv(b8, batch_tile)
    b_pad = n_tiles * batch_tile

    # --- input: only batch rows (and at most 7 K columns) are zero-padded ---
    k0 = _round_up(n_inp, _SUBLANE)            # first-layer K, sublane aligned
    x = state.astype(jnp.float32)
    if (b_pad, k0) != (batch, n_inp):
        x = jnp.pad(x, ((0, b_pad - batch), (0, k0 - n_inp)))

    kernel = functools.partial(_mlp_kernel, n_layers)

    if dims is None:
        dims = ((d_pad, d_pad),) * n_layers
    cost = pl.CostEstimate(
        flops=2 * batch * sum(fi * fo for fi, fo in dims),
        transcendentals=0,
        bytes_accessed=int(state.size * 4
                           + w_packed.size * w_packed.dtype.itemsize
                           + b_packed.size * 4
                           + batch * n_actions * 4),
    )

    out_pad = pl.pallas_call(
        kernel,
        out_shape=jax.ShapeDtypeStruct((b_pad, d_pad), jnp.float32),
        grid=(n_tiles,),
        in_specs=[
            # state: one batch tile per grid step; last dim equals full array dim
            pl.BlockSpec((batch_tile, k0), lambda i: (i, 0)),
            # packed weights / biases: constant block index -> fetched once,
            # VMEM-resident across the whole grid.
            pl.BlockSpec((n_layers, d_pad, d_pad), lambda i: (0, 0, 0)),
            pl.BlockSpec((n_layers, 1, d_pad), lambda i: (0, 0, 0)),
        ],
        out_specs=pl.BlockSpec((batch_tile, d_pad), lambda i: (i, 0)),
        compiler_params=pltpu.CompilerParams(
            # Only shard over v7x's 2 TCs when each core gets real work.
            dimension_semantics=(("parallel",) if n_tiles > 1 else ("arbitrary",))),
        cost_estimate=cost,
    )(x, w_packed, b_packed)

    return out_pad[:batch, :n_actions]


def init_linear_dqn_params(key, n_inp, features, n_actions):
    """Deterministic init mimicking torch.nn.Linear default U(-1/sqrt(fan_in), +)."""
    layer_sizes = [n_inp] + list(features) + [n_actions]
    params = []
    for i in range(len(layer_sizes) - 1):
        fan_in, fan_out = layer_sizes[i], layer_sizes[i + 1]
        key, kw, kb = jax.random.split(key, 3)
        bound = 1.0 / jnp.sqrt(jnp.float32(fan_in))
        # Stored as (in, out) == PyTorch weight.T
        w = jax.random.uniform(kw, (fan_in, fan_out), jnp.float32, -bound, bound)
        b = jax.random.uniform(kb, (1, fan_out), jnp.float32, -bound, bound)
        params.append((w, b))
    return params


def jax_reference_forward(state, params, param_dtype=jnp.float32):
    """Pure-JAX reference.  With param_dtype=bf16 it mirrors the kernel's
    quantization (bf16 dot inputs, f32 accumulation / bias / ReLU)."""
    h = state.astype(jnp.float32)
    for i, (w, b) in enumerate(params):
        h = jnp.dot(h.astype(param_dtype), w.astype(param_dtype),
                    preferred_element_type=jnp.float32) + b.astype(jnp.float32)
        if i != len(params) - 1:
            h = jnp.maximum(h, 0.0)
    return h


if __name__ == "__main__":
    # Small shapes consistent with Linear_Policy(n_inp, features, n_actions).
    # batch=32 stands in for "many env states / timesteps per call"; it runs as
    # a single grid step with the whole batch as one lane-dense block.
    n_inp = 16
    features = [32, 32]
    n_actions = 8
    batch = 32

    key = jax.random.PRNGKey(0)
    key, k_state = jax.random.split(key)
    state = jax.random.normal(k_state, (batch, n_inp), jnp.float32)

    # self.network parameters (the ones used in Linear_Policy.forward)
    params = init_linear_dqn_params(key, n_inp, features, n_actions)
    w_packed, b_packed, dims = pack_params(params, param_dtype=jnp.bfloat16)
    # TODO(synk): target_network forward, soft_update and the Adam optimizer are
    # training-time machinery, not part of the forward pass; not implemented here.

    out = linear_dqn_forward(state, w_packed, b_packed, n_actions, dims)
    out = jax.block_until_ready(out)
    assert out.shape == (batch, n_actions)

    # Tight check vs. a reference that uses the same bf16 weight quantization.
    ref_q = jax_reference_forward(state, params, param_dtype=jnp.bfloat16)
    assert jnp.allclose(out, ref_q, atol=1e-4, rtol=1e-4), "mismatch vs quantized reference"

    # Sanity check vs. the full-f32 reference (bounds the bf16 weight error).
    ref_f32 = jax_reference_forward(state, params, param_dtype=jnp.float32)
    assert jnp.allclose(out, ref_f32, atol=5e-2, rtol=0.0), "bf16 drift too large"

    print("KERNEL_OK")
</pallas_src>

<mosaic_0001>
module attributes {stable_mosaic.version = 11 : i64} {
  func.func @_mlp_kernel(%arg0: i32, %arg1: memref<32x16xf32, #tpu.memory_space<vmem>>, %arg2: memref<3x128x128xbf16, #tpu.memory_space<vmem>>, %arg3: memref<3x1x128xf32, #tpu.memory_space<vmem>>, %arg4: memref<32x128xf32, #tpu.memory_space<vmem>>) attributes {dimension_semantics = [#tpu.dimension_semantics<arbitrary>], iteration_bounds = array<i64: 1>, scalar_prefetch = 0 : i64, scratch_operands = 0 : i64, tpu.core_type = #tpu.core_type<tc>, window_params = [{transform_indices = @transform_0, window_bounds = array<i64: 32, 16>}, {pipeline_mode = #tpu.pipeline_mode<synchronous>, transform_indices = @transform_1, window_bounds = array<i64: 3, 128, 128>}, {pipeline_mode = #tpu.pipeline_mode<synchronous>, transform_indices = @transform_2, window_bounds = array<i64: 3, 1, 128>}, {transform_indices = @transform_3, window_bounds = array<i64: 32, 128>}]} {
    %c0 = arith.constant 0 : index
    %c0_0 = arith.constant 0 : index
    %0 = vector.load %arg1[%c0, %c0_0] : memref<32x16xf32, #tpu.memory_space<vmem>>, vector<32x16xf32>
    %c0_1 = arith.constant 0 : index
    %c0_2 = arith.constant 0 : index
    %c0_3 = arith.constant 0 : index
    %1 = vector.load %arg2[%c0_1, %c0_2, %c0_3] : memref<3x128x128xbf16, #tpu.memory_space<vmem>>, vector<1x16x128xbf16>
    %2 = vector.shape_cast %1 : vector<1x16x128xbf16> to vector<16x128xbf16>
    %c0_4 = arith.constant 0 : index
    %c0_5 = arith.constant 0 : index
    %c0_6 = arith.constant 0 : index
    %3 = vector.load %arg3[%c0_4, %c0_5, %c0_6] : memref<3x1x128xf32, #tpu.memory_space<vmem>>, vector<1x1x128xf32>
    %4 = vector.shape_cast %3 : vector<1x1x128xf32> to vector<1x128xf32>
    %5 = arith.truncf %0 : vector<32x16xf32> to vector<32x16xbf16>
    %cst = arith.constant dense<0.000000e+00> : vector<32x128xf32>
    %6 = tpu.matmul %5, %2, %cst {dimension_numbers = #tpu.dot_dimension_numbers<[1], [0], [0], [1], [0, 0, 1, 1], [], []>} : vector<32x16xbf16>, vector<16x128xbf16>, vector<32x128xf32> -> vector<32x128xf32>
    %7 = vector.broadcast %4 : vector<1x128xf32> to vector<32x128xf32>
    %8 = arith.addf %6, %7 : vector<32x128xf32>
    %cst_7 = arith.constant 0.000000e+00 : f32
    %9 = vector.broadcast %cst_7 : f32 to vector<32x128xf32>
    %10 = arith.maximumf %8, %9 : vector<32x128xf32>
    %c1 = arith.constant 1 : index
    %c0_8 = arith.constant 0 : index
    %c0_9 = arith.constant 0 : index
    %11 = vector.load %arg2[%c1, %c0_8, %c0_9] : memref<3x128x128xbf16, #tpu.memory_space<vmem>>, vector<1x128x128xbf16>
    %12 = vector.shape_cast %11 : vector<1x128x128xbf16> to vector<128x128xbf16>
    %c1_10 = arith.constant 1 : index
    %c0_11 = arith.constant 0 : index
    %c0_12 = arith.constant 0 : index
    %13 = vector.load %arg3[%c1_10, %c0_11, %c0_12] : memref<3x1x128xf32, #tpu.memory_space<vmem>>, vector<1x1x128xf32>
    %14 = vector.shape_cast %13 : vector<1x1x128xf32> to vector<1x128xf32>
    %15 = arith.truncf %10 : vector<32x128xf32> to vector<32x128xbf16>
    %cst_13 = arith.constant dense<0.000000e+00> : vector<32x128xf32>
    %16 = tpu.matmul %15, %12, %cst_13 {dimension_numbers = #tpu.dot_dimension_numbers<[1], [0], [0], [1], [0, 0, 1, 1], [], []>} : vector<32x128xbf16>, vector<128x128xbf16>, vector<32x128xf32> -> vector<32x128xf32>
    %17 = vector.broadcast %14 : vector<1x128xf32> to vector<32x128xf32>
    %18 = arith.addf %16, %17 : vector<32x128xf32>
    %cst_14 = arith.constant 0.000000e+00 : f32
    %19 = vector.broadcast %cst_14 : f32 to vector<32x128xf32>
    %20 = arith.maximumf %18, %19 : vector<32x128xf32>
    %c2 = arith.constant 2 : index
    %c0_15 = arith.constant 0 : index
    %c0_16 = arith.constant 0 : index
    %21 = vector.load %arg2[%c2, %c0_15, %c0_16] : memref<3x128x128xbf16, #tpu.memory_space<vmem>>, vector<1x128x128xbf16>
    %22 = vector.shape_cast %21 : vector<1x128x128xbf16> to vector<128x128xbf16>
    %c2_17 = arith.constant 2 : index
    %c0_18 = arith.constant 0 : index
    %c0_19 = arith.constant 0 : index
    %23 = vector.load %arg3[%c2_17, %c0_18, %c0_19] : memref<3x1x128xf32, #tpu.memory_space<vmem>>, vector<1x1x128xf32>
    %24 = vector.shape_cast %23 : vector<1x1x128xf32> to vector<1x128xf32>
    %25 = arith.truncf %20 : vector<32x128xf32> to vector<32x128xbf16>
    %cst_20 = arith.constant dense<0.000000e+00> : vector<32x128xf32>
    %26 = tpu.matmul %25, %22, %cst_20 {dimension_numbers = #tpu.dot_dimension_numbers<[1], [0], [0], [1], [0, 0, 1, 1], [], []>} : vector<32x128xbf16>, vector<128x128xbf16>, vector<32x128xf32> -> vector<32x128xf32>
    %27 = vector.broadcast %24 : vector<1x128xf32> to vector<32x128xf32>
    %28 = arith.addf %26, %27 : vector<32x128xf32>
    %c0_21 = arith.constant 0 : index
    %c0_22 = arith.constant 0 : index
    %29 = vector.load %arg4[%c0_21, %c0_22] : memref<32x128xf32, #tpu.memory_space<vmem>>, vector<32x128xf32>
    tpu.vector_store %arg4[%c0_21, %c0_22], %28 {strides = array<i32>} : memref<32x128xf32, #tpu.memory_space<vmem>>, vector<32x128xf32>,
    return
  }
  func.func @transform_0(%arg0: i32) -> (i32, i32) {
    %c0_i32 = arith.constant 0 : i32
    %c0_i32_0 = arith.constant 0 : i32
    return %arg0, %c0_i32 : i32, i32
  }
  func.func @transform_1(%arg0: i32) -> (i32, i32, i32) {
    %c0_i32 = arith.constant 0 : i32
    %c0_i32_0 = arith.constant 0 : i32
    %c0_i32_1 = arith.constant 0 : i32
    %c0_i32_2 = arith.constant 0 : i32
    return %c0_i32, %c0_i32_0, %c0_i32_1 : i32, i32, i32
  }
  func.func @transform_2(%arg0: i32) -> (i32, i32, i32) {
    %c0_i32 = arith.constant 0 : i32
    %c0_i32_0 = arith.constant 0 : i32
    %c0_i32_1 = arith.constant 0 : i32
    %c0_i32_2 = arith.constant 0 : i32
    return %c0_i32, %c0_i32_0, %c0_i32_1 : i32, i32, i32
  }
  func.func @transform_3(%arg0: i32) -> (i32, i32) {
    %c0_i32 = arith.constant 0 : i32
    %c0_i32_0 = arith.constant 0 : i32
    return %arg0, %c0_i32 : i32, i32
  }
}

</mosaic_0001>

<llo_original>
// kernel: tpu_custom_call.1
$region0: #{tpu_custom_call.1}
  #allocation0 [shape = 'u32[]', space=smem, size = 0x4, offset = 0x4, fixed_abs, tag = 'smem constant byte address 0x4 - core index']
  #allocation1 [shape = 'u32[72,128]{1,0:T(1,128)}', space=vmem, size = 0x9000, scoped, tag = 'internal scratch']
  %s0 = inlined_call_operand.vmem [shape: f32[32,16], index: 0, kind: input, shape index: {}]
  %s1 = inlined_call_operand.hbm [shape: bf16[3,128,128], index: 1, kind: input, shape index: {}]
  %s2 = inlined_call_operand.vmem [shape: f32[3,1,128], index: 2, kind: input, shape index: {}]
  %s3 = inlined_call_operand.hbm [shape: f32[32,128], index: 3, kind: output, shape index: {}]
  %s4 = sld [smem:[#allocation0]]
  $region26: #{tpu_custom_call.1} parent=0
    _
  %s6 = ssub.s32 1, %s4
  %s7 = scalar_select 0, %s6, %s4
  $region1: #{tpu_custom_call.1} parent=0
    #allocation2 [shape = 'u8[98304]{0}', space=vmem, size = 0x18000, scoped, tag = 'input window, operand 1, single buffered']
    #allocation3 [shape = 's32[1]{0}', space=sflag, size = 0x4, scoped, tag = 'scoped memory for tpu_custom_call.1']
    #allocation4 [shape = 's32[1]{0}', space=sflag, size = 0x4, scoped, tag = 'scoped memory for tpu_custom_call.1']
    #allocation5 [shape = 'u8[16384]{0}', space=vmem, size = 0x4000, scoped, tag = 'output window, operand 0, single buffered']
    %8 = vsyncpa [#allocation3], 0
    %9 = vsyncpa [#allocation4], 0
    // Predicated region
    $region2: #{tpu_custom_call.1} parent=1 // pred_check
      _
    $region3: #{tpu_custom_call.1} parent=1 // pred_check_branch
      %11 = sbr.rel (0) target = $region5
    $region4: #{tpu_custom_call.1} parent=1 // pred_region
      _
    $region5: #{tpu_custom_call.1} parent=1 // pred_fallthru
      _
    // Predicated region
    $region6: #{tpu_custom_call.1} parent=1 // pred_check
      _
    $region7: #{tpu_custom_call.1} parent=1 // pred_check_branch
      %13 = sbr.rel (0) target = $region9
    $region8: #{tpu_custom_call.1} parent=1 // pred_region
      %15 = vsyncadd [#allocation3], 0
      %s16 = sshll.u32 %s1, 4
      %s17 = int_to_ptr.hbm [resolvable:$true] %s16
      %s18 = sshll.u32 [#allocation2], 4
      %s19 = int_to_ptr.vmem [resolvable:$true] %s18
      %24 = dma.hbm_to_vmem [thread:$0]  %s17, 3072, %s19, [#allocation3], 64, 64, 4
    $region9: #{tpu_custom_call.1} parent=1 // pred_fallthru
      _
    // Predicated region
    $region10: #{tpu_custom_call.1} parent=1 // pred_check
      _
    $region11: #{tpu_custom_call.1} parent=1 // pred_check_branch
      %26 = sbr.rel (0) target = $region13
    $region12: #{tpu_custom_call.1} parent=1 // pred_region
      _
    $region13: #{tpu_custom_call.1} parent=1 // pred_fallthru
      _
    // Predicated region
    $region14: #{tpu_custom_call.1} parent=1 // pred_check
      _
    $region15: #{tpu_custom_call.1} parent=1 // pred_check_branch
      %28 = sbr.rel (0) target = $region17
    $region16: #{tpu_custom_call.1} parent=1 // pred_region
      %30 = dma.done [#allocation3], 3072
    $region17: #{tpu_custom_call.1} parent=1 // pred_fallthru
      _
    %v32 = vld [vmem:[%s0] sm:$0xff]
    %v33 = vld [vmem:[%s0 + $0x8] sm:$0xff]
    %v34 = vld [vmem:[%s0 + $0x10] sm:$0xff]
    %v35 = vld [vmem:[%s0 + $0x18] sm:$0xff]
    %v36 = vld [vmem:[#allocation2] sm:$0xf]
    %v37 = vld [vmem:[#allocation2 + $0x4] sm:$0xf]
    %v38 = vld [vmem:[%s2] sm:$0x1]
    %v39 = vpack.c.bf16 %v33, %v32
    %v40 = vpack.c.bf16 %v35, %v34
    %v42 = vperm.slane %v38, 0
    %v46 = vunpack.c.l.b16 %v36
    %v47 = vunpack.c.l.b16 %v37
    %v48 = vpack.c.b16 %v47, %v46
    %vm50 = vcmask 130048
    %v52 = vsel %vm50, %v39, 0
    %v55 = vsel %vm50, %v40, 0
    %57 = vmatpush.bf16.msra.mxu0 0
    %58 = vmatpush.bf16.msra.mxu0 0
    %59 = vmatpush.bf16.msra.mxu0 0
    %60 = vmatpush.bf16.msra.mxu0 0
    %61 = vmatpush.bf16.msra.mxu0 0
    %62 = vmatpush.bf16.msra.mxu0 0
    %63 = vmatpush.bf16.msra.mxu0 0
    %64 = vmatpush.bf16.msra.mxu0 %v48
    %65 = vmatmul.bf16.gmra.mxu0 %v52
    %v66 = vpop.f32.mrf.mxu0
    %v67 = vadd.f32 %v42, %v66
    %v68 = vpop.f32.mrf.mxu0
    %v69 = vadd.f32 %v42, %v68
    %70 = vmatmul.bf16.gmra.mxu0 %v55
    %v71 = vpop.f32.mrf.mxu0
    %v72 = vadd.f32 %v42, %v71
    %v73 = vpop.f32.mrf.mxu0
    %v74 = vadd.f32 %v42, %v73
    %75 = vdwg.mxu0
    %v76 = vmax.f32 %v67, 0.0
    %v77 = vmax.f32 %v69, 0.0
    %v78 = vmax.f32 %v72, 0.0
    %v79 = vmax.f32 %v74, 0.0
    %s80 = scalar_lea.vmem [#allocation2], 64
    %v81 = vld [vmem:[%s80] sm:$0xf]
    %v82 = vld [vmem:[%s80 + $0x4] sm:$0xf]
    %v83 = vld [vmem:[%s80 + $0x8] sm:$0xf]
    %v84 = vld [vmem:[%s80 + $0xc] sm:$0xf]
    %v85 = vld [vmem:[%s80 + $0x10] sm:$0xf]
    %v86 = vld [vmem:[%s80 + $0x14] sm:$0xf]
    %v87 = vld [vmem:[%s80 + $0x18] sm:$0xf]
    %v88 = vld [vmem:[%s80 + $0x1c] sm:$0xf]
    %v89 = vld [vmem:[%s80 + $0x20] sm:$0xf]
    %v90 = vld [vmem:[%s80 + $0x24] sm:$0xf]
    %v91 = vld [vmem:[%s80 + $0x28] sm:$0xf]
    %v92 = vld [vmem:[%s80 + $0x2c] sm:$0xf]
    %v93 = vld [vmem:[%s80 + $0x30] sm:$0xf]
    %v94 = vld [vmem:[%s80 + $0x34] sm:$0xf]
    %v95 = vld [vmem:[%s80 + $0x38] sm:$0xf]
    %v96 = vld [vmem:[%s80 + $0x3c] sm:$0xf]
    %s97 = scalar_lea.vmem %s2, 1
    %v98 = vld [vmem:[%s97] sm:$0x1]
    %v99 = vpack.c.bf16 %v77, %v76
    %v100 = vpack.c.bf16 %v79, %v78
    %v102 = vperm.slane %v98, 0
    %v120 = vunpack.c.l.b16 %v81
    %v121 = vunpack.c.l.b16 %v82
    %v122 = vunpack.c.l.b16 %v83
    %v123 = vunpack.c.l.b16 %v84
    %v124 = vunpack.c.l.b16 %v85
    %v125 = vunpack.c.l.b16 %v86
    %v126 = vunpack.c.l.b16 %v87
    %v127 = vunpack.c.l.b16 %v88
    %v128 = vunpack.c.l.b16 %v89
    %v129 = vunpack.c.l.b16 %v90
    %v130 = vunpack.c.l.b16 %v91
    %v131 = vunpack.c.l.b16 %v92
    %v132 = vunpack.c.l.b16 %v93
    %v133 = vunpack.c.l.b16 %v94
    %v134 = vunpack.c.l.b16 %v95
    %v135 = vunpack.c.l.b16 %v96
    %v136 = vpack.c.b16 %v121, %v120
    %v137 = vpack.c.b16 %v123, %v122
    %v138 = vpack.c.b16 %v125, %v124
    %v139 = vpack.c.b16 %v127, %v126
    %v140 = vpack.c.b16 %v129, %v128
    %v141 = vpack.c.b16 %v131, %v130
    %v142 = vpack.c.b16 %v133, %v132
    %v143 = vpack.c.b16 %v135, %v134
    %152 = vmatpush.bf16.msra.mxu0 %v143
    %153 = vmatpush.bf16.msra.mxu0 %v142
    %154 = vmatpush.bf16.msra.mxu0 %v141
    %155 = vmatpush.bf16.msra.mxu0 %v140
    %156 = vmatpush.bf16.msra.mxu0 %v139
    %157 = vmatpush.bf16.msra.mxu0 %v138
    %158 = vmatpush.bf16.msra.mxu0 %v137
    %159 = vmatpush.bf16.msra.mxu0 %v136
    %160 = vmatmul.bf16.gmra.mxu0 %v99
    %v161 = vpop.f32.mrf.mxu0
    %v162 = vadd.f32 %v102, %v161
    %v163 = vpop.f32.mrf.mxu0
    %v164 = vadd.f32 %v102, %v163
    %165 = vmatmul.bf16.gmra.mxu0 %v100
    %v166 = vpop.f32.mrf.mxu0
    %v167 = vadd.f32 %v102, %v166
    %v168 = vpop.f32.mrf.mxu0
    %v169 = vadd.f32 %v102, %v168
    %170 = vdwg.mxu0
    %v171 = vmax.f32 %v162, 0.0
    %v172 = vmax.f32 %v164, 0.0
    %v173 = vmax.f32 %v167, 0.0
    %v174 = vmax.f32 %v169, 0.0
    %s175 = scalar_lea.vmem [#allocation2], 128
    %v176 = vld [vmem:[%s175] sm:$0xf]
    %v177 = vld [vmem:[%s175 + $0x4] sm:$0xf]
    %v178 = vld [vmem:[%s175 + $0x8] sm:$0xf]
    %v179 = vld [vmem:[%s175 + $0xc] sm:$0xf]
    %v180 = vld [vmem:[%s175 + $0x10] sm:$0xf]
    %v181 = vld [vmem:[%s175 + $0x14] sm:$0xf]
    %v182 = vld [vmem:[%s175 + $0x18] sm:$0xf]
    %v183 = vld [vmem:[%s175 + $0x1c] sm:$0xf]
    %v184 = vld [vmem:[%s175 + $0x20] sm:$0xf]
    %v185 = vld [vmem:[%s175 + $0x24] sm:$0xf]
    %v186 = vld [vmem:[%s175 + $0x28] sm:$0xf]
    %v187 = vld [vmem:[%s175 + $0x2c] sm:$0xf]
    %v188 = vld [vmem:[%s175 + $0x30] sm:$0xf]
    %v189 = vld [vmem:[%s175 + $0x34] sm:$0xf]
    %v190 = vld [vmem:[%s175 + $0x38] sm:$0xf]
    %v191 = vld [vmem:[%s175 + $0x3c] sm:$0xf]
    %s192 = scalar_lea.vmem %s2, 2
    %v193 = vld [vmem:[%s192] sm:$0x1]
    %v194 = vpack.c.bf16 %v172, %v171
    %v195 = vpack.c.bf16 %v174, %v173
    %v197 = vperm.slane %v193, 0
    %v215 = vunpack.c.l.b16 %v176
    %v216 = vunpack.c.l.b16 %v177
    %v217 = vunpack.c.l.b16 %v178
    %v218 = vunpack.c.l.b16 %v179
    %v219 = vunpack.c.l.b16 %v180
    %v220 = vunpack.c.l.b16 %v181
    %v221 = vunpack.c.l.b16 %v182
    %v222 = vunpack.c.l.b16 %v183
    %v223 = vunpack.c.l.b16 %v184
    %v224 = vunpack.c.l.b16 %v185
    %v225 = vunpack.c.l.b16 %v186
    %v226 = vunpack.c.l.b16 %v187
    %v227 = vunpack.c.l.b16 %v188
    %v228 = vunpack.c.l.b16 %v189
    %v229 = vunpack.c.l.b16 %v190
    %v230 = vunpack.c.l.b16 %v191
    %v231 = vpack.c.b16 %v216, %v215
    %v232 = vpack.c.b16 %v218, %v217
    %v233 = vpack.c.b16 %v220, %v219
    %v234 = vpack.c.b16 %v222, %v221
    %v235 = vpack.c.b16 %v224, %v223
    %v236 = vpack.c.b16 %v226, %v225
    %v237 = vpack.c.b16 %v228, %v227
    %v238 = vpack.c.b16 %v230, %v229
    %247 = vmatpush.bf16.msra.mxu0 %v238
    %248 = vmatpush.bf16.msra.mxu0 %v237
    %249 = vmatpush.bf16.msra.mxu0 %v236
    %250 = vmatpush.bf16.msra.mxu0 %v235
    %251 = vmatpush.bf16.msra.mxu0 %v234
    %252 = vmatpush.bf16.msra.mxu0 %v233
    %253 = vmatpush.bf16.msra.mxu0 %v232
    %254 = vmatpush.bf16.msra.mxu0 %v231
    %255 = vmatmul.bf16.gmra.mxu0 %v194
    %v256 = vpop.f32.mrf.mxu0
    %v257 = vadd.f32 %v197, %v256
    %v258 = vpop.f32.mrf.mxu0
    %v259 = vadd.f32 %v197, %v258
    %260 = vmatmul.bf16.gmra.mxu0 %v195
    %v261 = vpop.f32.mrf.mxu0
    %v262 = vadd.f32 %v197, %v261
    %v263 = vpop.f32.mrf.mxu0
    %v264 = vadd.f32 %v197, %v263
    %265 = vdwg.mxu0
    %266 = vst [vmem:[#allocation5] sm:$0xff] %v257
    %267 = vst [vmem:[#allocation5 + $0x8] sm:$0xff] %v259
    %268 = vst [vmem:[#allocation5 + $0x10] sm:$0xff] %v262
    %269 = vst [vmem:[#allocation5 + $0x18] sm:$0xff] %v264
    // Predicated region
    $region18: #{tpu_custom_call.1} parent=1 // pred_check
      _
    $region19: #{tpu_custom_call.1} parent=1 // pred_check_branch
      %271 = sbr.rel (0) target = $region21
    $region20: #{tpu_custom_call.1} parent=1 // pred_region
      %273 = vsyncadd [#allocation4], 0
      %s274 = sshll.u32 [#allocation5], 4
      %s275 = int_to_ptr.vmem [resolvable:$true] %s274
      %s276 = sshll.u32 %s3, 4
      %s277 = int_to_ptr.hbm [resolvable:$true] %s276
      %282 = dma.vmem_to_hbm [thread:$0]  %s275, 512, %s277, [#allocation4], 128, 128, 8
    $region21: #{tpu_custom_call.1} parent=1 // pred_fallthru
      _
    // Predicated region
    $region22: #{tpu_custom_call.1} parent=1 // pred_check
      _
    $region23: #{tpu_custom_call.1} parent=1 // pred_check_branch
      %284 = sbr.rel (0) target = $region25
    $region24: #{tpu_custom_call.1} parent=1 // pred_region
      %286 = dma.done [#allocation4], 512
    $region25: #{tpu_custom_call.1} parent=1 // pred_fallthru
      _
    %287 = vsyncpa [#allocation3], 1
    %288 = vsyncpa [#allocation4], 1

</llo_original>
